<compile_context>
chip_gen: v6e
topology: v6e:2x2x1
jax: 0.10.0
libtpu: 0.0.40
codegen_flags: <defaults>
</compile_context>

<pallas_src>
import functools

import jax
import jax.numpy as jnp
from jax.experimental import pallas as pl
from jax.experimental.pallas import tpu as pltpu

_LANES = 128
_ACC_ROWS_MAX = 64  # 8 independent f32 accumulator vregs -> ILP for 4 VALU slots


def _round_up(x, m):
    return ((x + m - 1) // m) * m


def _chip_tuning():
    """Returns (block_byte_budget_per_input, vmem_limit_bytes, max_cores)."""
    kind = ""
    try:
        kind = jax.devices()[0].device_kind.lower()
    except Exception:
        pass
    if "v6" in kind:
        # v6e: 1 TensorCore, 128 MiB physical VMEM, ~1.4 TB/s -> go big on tiles.
        return 8 * 1024 * 1024, 48 * 1024 * 1024, 1
    if "v5 lite" in kind or "v5e" in kind or "v5lite" in kind:
        # v5e: 1 TensorCore, ~0.82 TB/s -> 4 MiB tiles already put the ~0.35 us
        # per-step overhead below 7%; keep the scoped-VMEM request modest.
        return 4 * 1024 * 1024, 24 * 1024 * 1024, 1
    if "v7" in kind or "v4" in kind:
        # 2 TensorCores per chip -> allow the "parallel" core split.
        return 4 * 1024 * 1024, 32 * 1024 * 1024, 2
    # Unknown chip: conservative defaults (also fine on v7x's 64 MiB VMEM).
    return 4 * 1024 * 1024, 32 * 1024 * 1024, 1


def _l1_partial_kernel(o_ref, t_ref, out_ref, *, total_rows, block_rows,
                       acc_rows, blocks_per_core, mask_from_block):
    """Accumulates per-core (acc_rows, 128) partial sums of |o - t|."""
    c = pl.program_id(0)   # core ("parallel") axis
    i = pl.program_id(1)   # row-block ("arbitrary") axis -- accumulator axis

    @pl.when(i == 0)
    def _():
        out_ref[...] = jnp.zeros_like(out_ref)

    absdiff = jnp.abs(o_ref[...].astype(jnp.float32)
                      - t_ref[...].astype(jnp.float32))

    def _fold(x):
        # (block_rows, 128) -> (acc_rows, 128): pure VPU adds over acc_rows/8
        # independent vreg chains; the cross-lane reduce to a scalar happens
        # once in the wrapper.
        return x.reshape(-1, acc_rows, _LANES).sum(axis=0)[None, :, :]

    if mask_from_block is None:
        # Shapes divide evenly: every block is interior, no mask anywhere.
        out_ref[...] += _fold(absdiff)
    else:
        raw_block = c * blocks_per_core + i
        is_boundary = raw_block >= mask_from_block

        @pl.when(jnp.logical_not(is_boundary))
        def _():
            out_ref[...] += _fold(absdiff)

        @pl.when(is_boundary)
        def _():
            # Masks (a) the OOB/padded rows of the last partial row-block and
            # (b) a fully duplicated clamped block when the block count does
            # not divide evenly across cores (row0 >= total_rows -> all zero).
            row0 = raw_block * block_rows
            local = jax.lax.broadcasted_iota(jnp.int32, absdiff.shape, 0)
            out_ref[...] += _fold(
                jnp.where(local + row0 < total_rows, absdiff, 0.0))


@jax.jit
def pallas_l1_loss(outputs, targets):
    """mean(|outputs - targets|) computed with a Pallas reduction kernel."""
    assert outputs.shape == targets.shape, (outputs.shape, targets.shape)
    n = outputs.size

    block_bytes, vmem_limit, max_cores = _chip_tuning()
    o_bytes = jnp.dtype(outputs.dtype).itemsize
    t_bytes = jnp.dtype(targets.dtype).itemsize
    itemsize = max(o_bytes, t_bytes)

    rows = n // _LANES
    rem = n - rows * _LANES

    o_flat = outputs.reshape(-1)   # contiguous reshape: free
    t_flat = targets.reshape(-1)

    if rem:
        # Tiny (<128 elem) lane tail handled in plain JAX.
        tail = jnp.sum(jnp.abs(o_flat[rows * _LANES:].astype(jnp.float32)
                               - t_flat[rows * _LANES:].astype(jnp.float32)))
    else:
        tail = jnp.float32(0.0)

    if rows == 0:
        return tail / jnp.float32(n)

    if rem == 0:
        # Common case (image tensors, C*H*W % 128 == 0): pure bitcast reshape,
        # no slice, no copy -- kernel reads exactly 2*n elements from HBM.
        o2 = o_flat.reshape(rows, _LANES)
        t2 = t_flat.reshape(rows, _LANES)
    else:
        # TODO(synk): this prefix slice may materialize a copy for
        # non-128-multiple sizes; acceptable fallback for the rare ragged case.
        o2 = o_flat[: rows * _LANES].reshape(rows, _LANES)
        t2 = t_flat[: rows * _LANES].reshape(rows, _LANES)

    # Dtype-aware block sizing: ~block_bytes per input per grid step, rounded
    # to a multiple of the accumulator height so the in-kernel fold is exact.
    max_block_rows = max(
        _ACC_ROWS_MAX,
        (block_bytes // (_LANES * itemsize)) // _ACC_ROWS_MAX * _ACC_ROWS_MAX)
    if rows <= _ACC_ROWS_MAX:
        block_rows = _round_up(rows, 8)
        acc_rows = block_rows
    else:
        block_rows = min(max_block_rows, _round_up(rows, _ACC_ROWS_MAX))
        acc_rows = _ACC_ROWS_MAX

    blocks_total = pl.cdiv(rows, block_rows)

    # Megacore split only on multi-TC chips and only when there are enough
    # blocks that one duplicated (fully masked) block is <1/8 of the work.
    num_cores = 2 if (max_cores == 2 and blocks_total >= 8) else 1
    bpc = pl.cdiv(blocks_total, num_cores)

    partial_last = (rows % block_rows != 0)
    has_dup = (blocks_total % num_cores != 0)
    if partial_last:
        mask_from_block = blocks_total - 1
    elif has_dup:
        mask_from_block = blocks_total
    else:
        mask_from_block = None

    def in_map(c, i):
        # Clamp so a duplicated block never issues a DMA past the array; the
        # duplicate is fully masked out inside the kernel.
        return (jnp.minimum(c * bpc + i, blocks_total - 1), 0)

    in_spec = pl.BlockSpec((block_rows, _LANES), in_map)
    out_spec = pl.BlockSpec((1, acc_rows, _LANES), lambda c, i: (c, 0, 0))

    cost = pl.CostEstimate(
        flops=3 * n,
        transcendentals=0,
        bytes_accessed=n * (o_bytes + t_bytes)
        + num_cores * acc_rows * _LANES * 4,
    )

    kernel = functools.partial(
        _l1_partial_kernel,
        total_rows=rows,
        block_rows=block_rows,
        acc_rows=acc_rows,
        blocks_per_core=bpc,
        mask_from_block=mask_from_block,
    )

    partials = pl.pallas_call(
        kernel,
        out_shape=jax.ShapeDtypeStruct((num_cores, acc_rows, _LANES),
                                       jnp.float32),
        grid_spec=pltpu.PrefetchScalarGridSpec(
            num_scalar_prefetch=0,
            grid=(num_cores, bpc),
            in_specs=[in_spec, in_spec],
            out_specs=out_spec,
        ),
        compiler_params=pltpu.CompilerParams(
            dimension_semantics=("parallel", "arbitrary"),
            vmem_limit_bytes=vmem_limit,
        ),
        cost_estimate=cost,
    )(o2, t2)

    total = jnp.sum(partials) + tail
    return total / jnp.float32(n)


class SetCriterion:
    """JAX/Pallas port of the IPT SetCriterion forward pass."""

    def __init__(self, losses, weight_dict):
        self.weight_dict = weight_dict
        self.losses = losses
        self.loss_dicts = {}

    def __call__(self, outputs, targets, *args, **kwargs):
        for k in self.losses.keys():
            loss = self.losses[k]
            if k == 'Loss':
                loss_dicts = loss(outputs, targets)
            else:
                loss_dicts = loss(outputs, targets, *args)
            if isinstance(loss_dicts, dict):
                self.loss_dicts.update(loss_dicts)
            else:
                self.loss_dicts.update({k: loss_dicts})
        return self.loss_dicts


if __name__ == "__main__":
    key = jax.random.PRNGKey(0)
    k1, k2, k3, k4, k5, k6 = jax.random.split(key, 6)

    # Primary demo: small shapes consistent with IPT derain image tensors (NCHW).
    B, C, H, W = 2, 3, 16, 16
    outputs = jax.random.normal(k1, (B, C, H, W), dtype=jnp.float32)
    targets = jax.random.normal(k2, (B, C, H, W), dtype=jnp.float32)

    criterion = SetCriterion(
        losses={'Loss': pallas_l1_loss},   # mirrors {'Loss': nn.L1Loss()}
        weight_dict={'Loss': 1},
    )

    loss_dicts = criterion(outputs, targets)
    loss_val = jax.block_until_ready(loss_dicts['Loss'])
    ref = jnp.mean(jnp.abs(outputs - targets))
    assert jnp.allclose(loss_val, ref, rtol=1e-5, atol=1e-6), (loss_val, ref)

    # Single large unmasked block (128-multiple, branch-free path).
    a = jax.random.normal(k3, (4, 3, 256, 256), dtype=jnp.float32)
    b = jax.random.normal(k4, (4, 3, 256, 256), dtype=jnp.float32)
    v1 = jax.block_until_ready(pallas_l1_loss(a, b))
    assert jnp.allclose(v1, jnp.mean(jnp.abs(a - b)), rtol=1e-5, atol=1e-6)

    # Multi-block with a partial (masked) last block.
    c_arr = jax.random.normal(k5, (20000, 128), dtype=jnp.float32)
    d_arr = jax.random.normal(k6, (20000, 128), dtype=jnp.float32)
    v2 = jax.block_until_ready(pallas_l1_loss(c_arr, d_arr))
    assert jnp.allclose(v2, jnp.mean(jnp.abs(c_arr - d_arr)), rtol=1e-5, atol=1e-6)

    # Non-lane-aligned (n % 128 != 0) tail path.
    e_arr = jax.random.normal(k1, (2, 3, 15, 17), dtype=jnp.float32)
    f_arr = jax.random.normal(k2, (2, 3, 15, 17), dtype=jnp.float32)
    v3 = jax.block_until_ready(pallas_l1_loss(e_arr, f_arr))
    assert jnp.allclose(v3, jnp.mean(jnp.abs(e_arr - f_arr)), rtol=1e-5, atol=1e-6)

    # bf16 inputs exercise the dtype-aware block sizing (f32 accumulation).
    g_arr = jax.random.normal(k3, (4, 3, 64, 64), dtype=jnp.bfloat16)
    h_arr = jax.random.normal(k4, (4, 3, 64, 64), dtype=jnp.bfloat16)
    v4 = jax.block_until_ready(pallas_l1_loss(g_arr, h_arr))
    ref4 = jnp.mean(jnp.abs(g_arr.astype(jnp.float32) - h_arr.astype(jnp.float32)))
    assert jnp.allclose(v4, ref4, rtol=1e-5, atol=1e-6), (v4, ref4)

    print("KERNEL_OK")
</pallas_src>

<mosaic_0001>
module attributes {stable_mosaic.version = 11 : i64} {
  func.func @_l1_partial_kernel(%arg0: i32, %arg1: i32, %arg2: memref<16x128xf32, #tpu.memory_space<vmem>>, %arg3: memref<16x128xf32, #tpu.memory_space<vmem>>, %arg4: memref<1x16x128xf32, #tpu.memory_space<vmem>>) attributes {dimension_semantics = [#tpu.dimension_semantics<parallel>, #tpu.dimension_semantics<arbitrary>], iteration_bounds = array<i64: 1, 1>, scalar_prefetch = 0 : i64, scratch_operands = 0 : i64, tpu.core_type = #tpu.core_type<tc>, window_params = [{transform_indices = @transform_0, window_bounds = array<i64: 16, 128>}, {transform_indices = @transform_1, window_bounds = array<i64: 16, 128>}, {transform_indices = @transform_2, window_bounds = array<i64: 1, 16, 128>}]} {
    %c0_i32 = arith.constant 0 : i32
    %0 = arith.cmpi eq, %arg1, %c0_i32 : i32
    %1 = arith.extui %0 : i1 to i32
    %c0_i32_0 = arith.constant 0 : i32
    %2 = arith.cmpi ne, %1, %c0_i32_0 : i32
    scf.if %2 {
      %cst = arith.constant 0.000000e+00 : f32
      %15 = vector.broadcast %cst : f32 to vector<1x16x128xf32>
      %c0_7 = arith.constant 0 : index
      %c0_8 = arith.constant 0 : index
      %c0_9 = arith.constant 0 : index
      %16 = vector.load %arg4[%c0_7, %c0_8, %c0_9] : memref<1x16x128xf32, #tpu.memory_space<vmem>>, vector<1x16x128xf32>
      tpu.vector_store %arg4[%c0_7, %c0_8, %c0_9], %15 {strides = array<i32>} : memref<1x16x128xf32, #tpu.memory_space<vmem>>, vector<1x16x128xf32>,
    } else {
    }
    %c0 = arith.constant 0 : index
    %c0_1 = arith.constant 0 : index
    %3 = vector.load %arg2[%c0, %c0_1] : memref<16x128xf32, #tpu.memory_space<vmem>>, vector<16x128xf32>
    %c0_2 = arith.constant 0 : index
    %c0_3 = arith.constant 0 : index
    %4 = vector.load %arg3[%c0_2, %c0_3] : memref<16x128xf32, #tpu.memory_space<vmem>>, vector<16x128xf32>
    %5 = arith.subf %3, %4 : vector<16x128xf32>
    %6 = math.absf %5 : vector<16x128xf32>
    %c1_i32 = arith.constant 1 : i32
    %7 = arith.muli %arg0, %c1_i32 : i32
    %8 = arith.addi %7, %arg1 : i32
    %c0_i32_4 = arith.constant 0 : i32
    %9 = arith.cmpi sge, %8, %c0_i32_4 : i32
    %true = arith.constant true
    %10 = arith.xori %9, %true : i1
    %11 = arith.extui %10 : i1 to i32
    %c0_i32_5 = arith.constant 0 : i32
    %12 = arith.cmpi ne, %11, %c0_i32_5 : i32
    scf.if %12 {
      %c0_7 = arith.constant 0 : index
      %c0_8 = arith.constant 0 : index
      %c0_9 = arith.constant 0 : index
      %15 = vector.load %arg4[%c0_7, %c0_8, %c0_9] : memref<1x16x128xf32, #tpu.memory_space<vmem>>, vector<1x16x128xf32>
      %16 = vector.shape_cast %6 : vector<16x128xf32> to vector<1x16x128xf32>
      %cst = arith.constant dense<0.000000e+00> : vector<16x128xf32>
      %17 = vector.multi_reduction <add>, %16, %cst [0] : vector<1x16x128xf32> to vector<16x128xf32>
      %18 = vector.shape_cast %17 : vector<16x128xf32> to vector<1x16x128xf32>
      %19 = arith.addf %15, %18 : vector<1x16x128xf32>
      %c0_10 = arith.constant 0 : index
      %c0_11 = arith.constant 0 : index
      %c0_12 = arith.constant 0 : index
      %20 = vector.load %arg4[%c0_10, %c0_11, %c0_12] : memref<1x16x128xf32, #tpu.memory_space<vmem>>, vector<1x16x128xf32>
      tpu.vector_store %arg4[%c0_10, %c0_11, %c0_12], %19 {strides = array<i32>} : memref<1x16x128xf32, #tpu.memory_space<vmem>>, vector<1x16x128xf32>,
    } else {
    }
    %13 = arith.extui %9 : i1 to i32
    %c0_i32_6 = arith.constant 0 : i32
    %14 = arith.cmpi ne, %13, %c0_i32_6 : i32
    scf.if %14 {
      %c16_i32 = arith.constant 16 : i32
      %15 = arith.muli %8, %c16_i32 : i32
      %16 = tpu.iota {dimensions = array<i32: 0>} : vector<16x128xi32>
      %c0_7 = arith.constant 0 : index
      %c0_8 = arith.constant 0 : index
      %c0_9 = arith.constant 0 : index
      %17 = vector.load %arg4[%c0_7, %c0_8, %c0_9] : memref<1x16x128xf32, #tpu.memory_space<vmem>>, vector<1x16x128xf32>
      %18 = vector.broadcast %15 : i32 to vector<16x128xi32>
      %19 = arith.addi %16, %18 : vector<16x128xi32>
      %c12_i32 = arith.constant 12 : i32
      %20 = vector.broadcast %c12_i32 : i32 to vector<16x128xi32>
      %21 = arith.cmpi slt, %19, %20 : vector<16x128xi32>
      %cst = arith.constant 0.000000e+00 : f32
      %22 = vector.broadcast %cst : f32 to vector<16x128xf32>
      %23 = arith.select %21, %6, %22 : vector<16x128xi1>, vector<16x128xf32>
      %24 = vector.shape_cast %23 : vector<16x128xf32> to vector<1x16x128xf32>
      %cst_10 = arith.constant dense<0.000000e+00> : vector<16x128xf32>
      %25 = vector.multi_reduction <add>, %24, %cst_10 [0] : vector<1x16x128xf32> to vector<16x128xf32>
      %26 = vector.shape_cast %25 : vector<16x128xf32> to vector<1x16x128xf32>
      %27 = arith.addf %17, %26 : vector<1x16x128xf32>
      %c0_11 = arith.constant 0 : index
      %c0_12 = arith.constant 0 : index
      %c0_13 = arith.constant 0 : index
      %28 = vector.load %arg4[%c0_11, %c0_12, %c0_13] : memref<1x16x128xf32, #tpu.memory_space<vmem>>, vector<1x16x128xf32>
      tpu.vector_store %arg4[%c0_11, %c0_12, %c0_13], %27 {strides = array<i32>} : memref<1x16x128xf32, #tpu.memory_space<vmem>>, vector<1x16x128xf32>,
    } else {
    }
    return
  }
  func.func @transform_0(%arg0: i32, %arg1: i32) -> (i32, i32) {
    %c1_i32 = arith.constant 1 : i32
    %0 = arith.muli %arg0, %c1_i32 : i32
    %1 = arith.addi %0, %arg1 : i32
    %c0_i32 = arith.constant 0 : i32
    %2 = arith.minsi %1, %c0_i32 : i32
    %c0_i32_0 = arith.constant 0 : i32
    %c0_i32_1 = arith.constant 0 : i32
    return %2, %c0_i32_0 : i32, i32
  }
  func.func @transform_1(%arg0: i32, %arg1: i32) -> (i32, i32) {
    %c1_i32 = arith.constant 1 : i32
    %0 = arith.muli %arg0, %c1_i32 : i32
    %1 = arith.addi %0, %arg1 : i32
    %c0_i32 = arith.constant 0 : i32
    %2 = arith.minsi %1, %c0_i32 : i32
    %c0_i32_0 = arith.constant 0 : i32
    %c0_i32_1 = arith.constant 0 : i32
    return %2, %c0_i32_0 : i32, i32
  }
  func.func @transform_2(%arg0: i32, %arg1: i32) -> (i32, i32, i32) {
    %c0_i32 = arith.constant 0 : i32
    %c0_i32_0 = arith.constant 0 : i32
    %c0_i32_1 = arith.constant 0 : i32
    return %arg0, %c0_i32, %c0_i32_0 : i32, i32, i32
  }
}

</mosaic_0001>

<llo_original>
// kernel: pallas_l1_loss.1
$region0: #{pallas_l1_loss.1}
  #allocation0 [shape = 'u32[]', space=smem, size = 0x4, offset = 0x4, fixed_abs, tag = 'smem constant byte address 0x4 - core index']
  #allocation1 [shape = 'u32[144,128]{1,0:T(1,128)}', space=vmem, size = 0x12000, scoped, tag = 'internal scratch']
  %s0 = inlined_call_operand.vmem [shape: f32[12,128], index: 0, kind: input, shape index: {}]
  %s1 = inlined_call_operand.vmem [shape: f32[12,128], index: 1, kind: input, shape index: {}]
  %s2 = inlined_call_operand.vmem [shape: f32[1,16,128], index: 2, kind: output, shape index: {}]
  %s3 = sld [smem:[#allocation0]]
  $region30: #{pallas_l1_loss.1} parent=0
    _
  %s5 = ssub.s32 1, %s3
  %s6 = scalar_select 0, %s5, %s3
  // Predicated region
  $region2: #{pallas_l1_loss.1} parent=0 // pred_check
    _
  $region3: #{pallas_l1_loss.1} parent=0 // pred_check_branch
    %8 = sbr.rel (0) target = $region5
  $region4: #{pallas_l1_loss.1} parent=0 // pred_region
    %s9 = sadd.s32 0, 0
    %p10 = scmp.lt.s32.totalorder %s9, 0
    %s11 = scalar_select %p10, %s9, 0
    %s12 = smul.u32 2, %s11
    %p13 = scmp.lt.s32.totalorder %s12, 1
    %s14 = scalar_select %p13, %s12, 1
    %s15 = smul.addr %s14, 8
    %s16 = scalar_lea.vmem %s0, %s15
    %s17 = sadd.s32 0, 0
    %p18 = scmp.lt.s32.totalorder %s17, 0
    %s19 = scalar_select %p18, %s17, 0
    %s20 = smul.u32 2, %s19
  $region5: #{pallas_l1_loss.1} parent=0 // pred_fallthru
    _
  // Predicated region
  $region6: #{pallas_l1_loss.1} parent=0 // pred_check
    _
  $region7: #{pallas_l1_loss.1} parent=0 // pred_check_branch
    %22 = sbr.rel (0) target = $region9
  $region8: #{pallas_l1_loss.1} parent=0 // pred_region
    %s23 = sadd.s32 0, 0
    %p24 = scmp.lt.s32.totalorder %s23, 0
    %s25 = scalar_select %p24, %s23, 0
    %s26 = smul.u32 2, %s25
    %p27 = scmp.lt.s32.totalorder %s26, 1
    %s28 = scalar_select %p27, %s26, 1
    %s29 = smul.addr %s28, 8
    %s30 = scalar_lea.vmem %s1, %s29
    %s31 = sadd.s32 0, 0
    %p32 = scmp.lt.s32.totalorder %s31, 0
    %s33 = scalar_select %p32, %s31, 0
    %s34 = smul.u32 2, %s33
  $region9: #{pallas_l1_loss.1} parent=0 // pred_fallthru
    _
  %s35 = sadd.s32 0, 0
  %p36 = scmp.lt.s32.totalorder %s35, 0
  %s37 = scalar_select %p36, %s35, 0
  %s38 = smul.u32 2, %s37
  %p39 = scmp.lt.s32.totalorder %s38, 1
  %s40 = scalar_select %p39, %s38, 1
  %s41 = smul.addr %s40, 8
  %s42 = scalar_lea.vmem %s0, %s41
  %s43 = sadd.s32 0, 0
  %p44 = scmp.lt.s32.totalorder %s43, 0
  %s45 = scalar_select %p44, %s43, 0
  %s46 = smul.u32 2, %s45
  %p47 = scmp.lt.s32.totalorder %s46, 1
  %s48 = scalar_select %p47, %s46, 1
  %s49 = smul.addr %s48, 8
  %s50 = scalar_lea.vmem %s1, %s49
  %s51 = sadd.s32 0, 0
  %p52 = scmp.lt.s32.totalorder %s51, 0
  %s53 = scalar_select %p52, %s51, 0
  %s54 = smul.u32 2, %s53
  %p55 = scmp.lt.s32.totalorder %s54, 1
  %s56 = scalar_select %p55, %s54, 1
  %s57 = smul.addr %s56, 8
  %s58 = scalar_lea.vmem %s0, %s57
  %s59 = sadd.s32 0, 0
  %p60 = scmp.lt.s32.totalorder %s59, 0
  %s61 = scalar_select %p60, %s59, 0
  %s62 = smul.u32 2, %s61
  %s63 = sadd.s32 0, 0
  %p64 = scmp.lt.s32.totalorder %s63, 0
  %s65 = scalar_select %p64, %s63, 0
  %s66 = smul.u32 2, %s65
  %p67 = scmp.lt.s32.totalorder %s66, 1
  %s68 = scalar_select %p67, %s66, 1
  %s69 = smul.addr %s68, 8
  %s70 = scalar_lea.vmem %s1, %s69
  %s71 = sadd.s32 0, 0
  %p72 = scmp.lt.s32.totalorder %s71, 0
  %s73 = scalar_select %p72, %s71, 0
  %s74 = smul.u32 2, %s73
  %p75 = scmp.eq.s32.totalorder 0, 0
  // Predicated region
  $region10: #{pallas_l1_loss.1} parent=0 // pred_check
    %p76 = pneg %p75
  $region11: #{pallas_l1_loss.1} parent=0 // pred_check_branch
    %78 = sbr.rel (%p76) target = $region13
  $region12: #{pallas_l1_loss.1} parent=0 // pred_region
    %79 = vst [vmem:[%s2] sm:$0xff] 0.0
    %80 = vst [vmem:[%s2 + $0x8] sm:$0xff] 0.0
  $region13: #{pallas_l1_loss.1} parent=0 // pred_fallthru
    _
  %v81 = vld [vmem:[%s58] sm:$0xff]
  %v82 = vld [vmem:[%s58 + $0x8] sm:$0xff]
  %v83 = vld [vmem:[%s70] sm:$0xff]
  %v84 = vld [vmem:[%s70 + $0x8] sm:$0xff]
  %v85 = vsub.f32 %v81, %v83
  %v86 = vsub.f32 %v82, %v84
  %v87 = vand.u32 2147483647, %v85
  %v88 = vand.u32 2147483647, %v86
  %s89 = sadd.s32 0, 0
  %p90 = scmp.ge.s32.totalorder %s89, 0
  %p91 = scmp.lt.s32.totalorder %s89, 0
  // Predicated region
  $region14: #{pallas_l1_loss.1} parent=0 // pred_check
    %p92 = pneg %p91
  $region15: #{pallas_l1_loss.1} parent=0 // pred_check_branch
    %94 = sbr.rel (%p92) target = $region17
  $region16: #{pallas_l1_loss.1} parent=0 // pred_region
    %v95 = vld [vmem:[%s2] sm:$0xff]
    %v96 = vld [vmem:[%s2 + $0x8] sm:$0xff]
    %v97 = vadd.f32 %v87, 0.0
    %v98 = vadd.f32 %v88, 0.0
    %v99 = vadd.f32 %v95, %v97
    %v100 = vadd.f32 %v96, %v98
    %101 = vst [vmem:[%s2] sm:$0xff] %v99
    %102 = vst [vmem:[%s2 + $0x8] sm:$0xff] %v100
  $region17: #{pallas_l1_loss.1} parent=0 // pred_fallthru
    _
  // Predicated region
  $region18: #{pallas_l1_loss.1} parent=0 // pred_check
    %p103 = pneg %p90
  $region19: #{pallas_l1_loss.1} parent=0 // pred_check_branch
    %105 = sbr.rel (%p103) target = $region21
  $region20: #{pallas_l1_loss.1} parent=0 // pred_region
    %s106 = smul.u32 %s89, 16
    %v107 = vlaneseq
    %v108 = vshrl.u32 %v107, 7
    %v109 = vadd.s32 %v108, 8
    %v110 = vld [vmem:[%s2] sm:$0xff]
    %v111 = vld [vmem:[%s2 + $0x8] sm:$0xff]
    %v112 = vstv %s106
    %v113 = vadd.s32 %v108, %v112
    %v114 = vadd.s32 %v109, %v112
    %vm115 = vcmp.lt.s32.totalorder %v113, 12
    %vm116 = vcmp.lt.s32.totalorder %v114, 12
    %v117 = vsel %vm115, %v87, 0.0
    %v118 = vsel %vm116, %v88, 0.0
    %v119 = vadd.f32 %v117, 0.0
    %v120 = vadd.f32 %v118, 0.0
    %v121 = vadd.f32 %v110, %v119
    %v122 = vadd.f32 %v111, %v120
    %123 = vst [vmem:[%s2] sm:$0xff] %v121
    %124 = vst [vmem:[%s2 + $0x8] sm:$0xff] %v122
  $region21: #{pallas_l1_loss.1} parent=0 // pred_fallthru
    _
  // Predicated region
  $region22: #{pallas_l1_loss.1} parent=0 // pred_check
    _
  $region23: #{pallas_l1_loss.1} parent=0 // pred_check_branch
    %126 = sbr.rel (0) target = $region25
  $region24: #{pallas_l1_loss.1} parent=0 // pred_region
    _
  $region25: #{pallas_l1_loss.1} parent=0 // pred_fallthru
    _
  // Predicated region
  $region26: #{pallas_l1_loss.1} parent=0 // pred_check
    _
  $region27: #{pallas_l1_loss.1} parent=0 // pred_check_branch
    %128 = sbr.rel (0) target = $region29
  $region28: #{pallas_l1_loss.1} parent=0 // pred_region
    _
  $region29: #{pallas_l1_loss.1} parent=0 // pred_fallthru
    _

</llo_original>
